<compile_context>
chip_gen: v7x
topology: tpu7x:2x2x1
jax: 0.10.0
libtpu: 0.0.40
codegen_flags: <defaults>
</compile_context>

<pallas_src>
import functools
import math

import jax
import jax.numpy as jnp
from jax.experimental import pallas as pl
from jax.experimental.pallas import tpu as pltpu


def _round_up(x, m):
    return ((x + m - 1) // m) * m


def _patch_embed_kernel(x_ref, w_ref, b_ref, g_ref, bt_ref, o_ref, *, eps,
                        inv_e):
    # Patch projection on the MXU: bf16 operands, f32 accumulation.
    y = jnp.dot(x_ref[...], w_ref[...], preferred_element_type=jnp.float32)
    y = y + b_ref[...]                            # (tm, E) + (1, E) broadcast
    # One-pass LayerNorm statistics over the (real) embedding dim.  If E was
    # padded up to a lane multiple, the padded y columns are exactly zero and
    # contribute nothing to the sums; the divisor is the real E (inv_e).
    s = jnp.sum(y, axis=-1, keepdims=True)
    ss = jnp.sum(y * y, axis=-1, keepdims=True)
    mean = s * inv_e
    var = ss * inv_e - mean * mean
    inv = jax.lax.rsqrt(var + eps)                # EUP rsqrt (free slot)
    o_ref[...] = ((y - mean) * inv * g_ref[...] + bt_ref[...]).astype(
        o_ref.dtype)


def patch_embed_pallas(x, w, b, gamma, beta, *, patch_size, tile_m=None,
                       eps=1e-5, out_dtype=jnp.bfloat16):
    """x: (B, C, H, W).  w: (E, C, p, p).  b/gamma/beta: (E,).

    Returns (tokens (B, num_patches, E) in `out_dtype`, (H // p, W // p)).
    """
    B, C, H, W = x.shape
    p = patch_size
    assert H % p == 0 and W % p == 0, "image size must be divisible by patch"
    Hp, Wp = H // p, W // p
    N = Hp * Wp
    E = w.shape[0]
    K = C * p * p
    M = B * N

    # im2col for non-overlapping patches; (c, ph, pw) ordering matches the
    # Conv2d weight layout (E, C, p, p).  Cast to bf16 *before* the transpose
    # so the layout shuffle only moves half the bytes.
    xb = x.astype(jnp.bfloat16)
    patches = (xb.reshape(B, C, Hp, p, Wp, p)
                 .transpose(0, 2, 4, 1, 3, 5)
                 .reshape(M, K))

    # Lane-dense output for any embed_dim: pad E to a multiple of 128 with
    # zero weight/bias columns (exactly zero y columns -> stats unaffected).
    E_pad = max(128, _round_up(E, 128))
    w2d = w.reshape(E, K).T.astype(jnp.bfloat16)          # (K, E)
    b_2d = b.reshape(1, E).astype(jnp.float32)
    g_2d = gamma.reshape(1, E).astype(jnp.float32)
    bt_2d = beta.reshape(1, E).astype(jnp.float32)
    if E_pad != E:
        pe = E_pad - E
        w2d = jnp.pad(w2d, ((0, 0), (0, pe)))
        b_2d = jnp.pad(b_2d, ((0, 0), (0, pe)))
        g_2d = jnp.pad(g_2d, ((0, 0), (0, pe)))
        bt_2d = jnp.pad(bt_2d, ((0, 0), (0, pe)))

    # Row tile: large to amortize per-grid-step overhead, clamped so the grid
    # keeps >= 2 steps (v7x megacore sharding) and stays sublane-aligned.
    if tile_m is None:
        tile_m = min(2048, _round_up(pl.cdiv(M, 2), 256))
    num_tiles = pl.cdiv(M, tile_m)    # ragged last block handled by Pallas

    out_itemsize = jnp.dtype(out_dtype).itemsize
    cost = pl.CostEstimate(
        flops=2 * M * K * E_pad,
        transcendentals=M,                        # one rsqrt per token row
        bytes_accessed=(M * K * 2 + K * E_pad * 2 + 3 * E_pad * 4
                        + M * E_pad * out_itemsize),
    )

    out2d = pl.pallas_call(
        functools.partial(_patch_embed_kernel, eps=eps, inv_e=1.0 / float(E)),
        out_shape=jax.ShapeDtypeStruct((M, E_pad), out_dtype),
        grid_spec=pltpu.PrefetchScalarGridSpec(
            num_scalar_prefetch=0,
            grid=(num_tiles,),
            in_specs=[
                pl.BlockSpec((tile_m, K), lambda i: (i, 0)),     # patch rows
                pl.BlockSpec((K, E_pad), lambda i: (0, 0)),      # proj weight
                pl.BlockSpec((1, E_pad), lambda i: (0, 0)),      # proj bias
                pl.BlockSpec((1, E_pad), lambda i: (0, 0)),      # LN gamma
                pl.BlockSpec((1, E_pad), lambda i: (0, 0)),      # LN beta
            ],
            out_specs=pl.BlockSpec((tile_m, E_pad), lambda i: (i, 0)),
        ),
        compiler_params=pltpu.CompilerParams(
            dimension_semantics=("parallel",),
        ),
        cost_estimate=cost,
    )(patches, w2d, b_2d, g_2d, bt_2d)

    tokens = out2d[:, :E].reshape(B, N, E)
    return tokens, (Hp, Wp)


def init_patch_embed_params(key, in_chans, embed_dim, patch_size):
    """Deterministic init mimicking nn.Conv2d / nn.LayerNorm defaults."""
    k1, k2, k3, k4 = jax.random.split(key, 4)
    fan_in = in_chans * patch_size * patch_size
    bound = 1.0 / math.sqrt(fan_in)
    w = jax.random.uniform(k1, (embed_dim, in_chans, patch_size, patch_size),
                           jnp.float32, -bound, bound)
    b = jax.random.uniform(k2, (embed_dim,), jnp.float32, -bound, bound)
    gamma = 1.0 + 0.1 * jax.random.normal(k3, (embed_dim,), jnp.float32)
    beta = 0.05 * jax.random.normal(k4, (embed_dim,), jnp.float32)
    return w, b, gamma, beta


def patch_embed_reference(x, w, b, gamma, beta, *, patch_size, eps=1e-5):
    p = patch_size
    y = jax.lax.conv_general_dilated(
        x, w, window_strides=(p, p), padding="VALID",
        dimension_numbers=("NCHW", "OIHW", "NCHW"))
    y = y + b.reshape(1, -1, 1, 1)
    B, E, Hp, Wp = y.shape
    y = y.reshape(B, E, Hp * Wp).transpose(0, 2, 1)       # (B, N, E)
    mean = jnp.mean(y, axis=-1, keepdims=True)
    var = jnp.mean((y - mean) ** 2, axis=-1, keepdims=True)
    y = (y - mean) / jnp.sqrt(var + eps)
    return y * gamma + beta, (Hp, Wp)


if __name__ == "__main__":
    # Small shapes consistent with PatchEmbed: batch=2, in_chans=3, 64x64
    # image, patch 4 -> 256 tokens/image (M = 512 rows -> 2 grid steps at the
    # auto tile_m=256), embed_dim=128 (lane-dense output, no E padding).
    B, C, IMG, P, E = 2, 3, 64, 4, 128
    key = jax.random.PRNGKey(0)
    kx, kp = jax.random.split(key)
    x = jax.random.normal(kx, (B, C, IMG, IMG), jnp.float32)
    w, b, gamma, beta = init_patch_embed_params(kp, C, E, P)

    # jit the wrapper so the bf16 cast + im2col transpose fuse with the
    # pallas_call input instead of round-tripping HBM separately.
    run = jax.jit(lambda x, w, b, g, bt:
                  patch_embed_pallas(x, w, b, g, bt, patch_size=P)[0])
    out = jax.block_until_ready(run(x, w, b, gamma, beta))

    ref, (Hr, Wr) = patch_embed_reference(x, w, b, gamma, beta, patch_size=P)
    Hp, Wp = IMG // P, IMG // P
    assert out.shape == (B, Hp * Wp, E), out.shape
    assert out.dtype == jnp.bfloat16, out.dtype
    assert (Hr, Wr) == (Hp, Wp)

    out_f32 = out.astype(jnp.float32)
    max_err = float(jnp.max(jnp.abs(out_f32 - ref)))
    # bf16 MXU operands + bf16 token output vs. the f32 reference.
    assert jnp.allclose(out_f32, ref, atol=6e-2, rtol=6e-2), max_err

    print("KERNEL_OK")
</pallas_src>

<mosaic_0001>
module attributes {stable_mosaic.version = 11 : i64} {
  func.func @_patch_embed_kernel(%arg0: i32, %arg1: memref<256x48xbf16, #tpu.memory_space<vmem>>, %arg2: memref<48x128xbf16, #tpu.memory_space<vmem>>, %arg3: memref<1x128xf32, #tpu.memory_space<vmem>>, %arg4: memref<1x128xf32, #tpu.memory_space<vmem>>, %arg5: memref<1x128xf32, #tpu.memory_space<vmem>>, %arg6: memref<256x128xbf16, #tpu.memory_space<vmem>>) attributes {dimension_semantics = [#tpu.dimension_semantics<parallel>], iteration_bounds = array<i64: 2>, scalar_prefetch = 0 : i64, scratch_operands = 0 : i64, tpu.core_type = #tpu.core_type<tc>, window_params = [{transform_indices = @transform_0, window_bounds = array<i64: 256, 48>}, {pipeline_mode = #tpu.pipeline_mode<synchronous>, transform_indices = @transform_1, window_bounds = array<i64: 48, 128>}, {pipeline_mode = #tpu.pipeline_mode<synchronous>, transform_indices = @transform_2, window_bounds = array<i64: 1, 128>}, {pipeline_mode = #tpu.pipeline_mode<synchronous>, transform_indices = @transform_3, window_bounds = array<i64: 1, 128>}, {pipeline_mode = #tpu.pipeline_mode<synchronous>, transform_indices = @transform_4, window_bounds = array<i64: 1, 128>}, {transform_indices = @transform_5, window_bounds = array<i64: 256, 128>}]} {
    %c0 = arith.constant 0 : index
    %c0_0 = arith.constant 0 : index
    %0 = vector.load %arg1[%c0, %c0_0] : memref<256x48xbf16, #tpu.memory_space<vmem>>, vector<256x48xbf16>
    %c0_1 = arith.constant 0 : index
    %c0_2 = arith.constant 0 : index
    %1 = vector.load %arg2[%c0_1, %c0_2] : memref<48x128xbf16, #tpu.memory_space<vmem>>, vector<48x128xbf16>
    %cst = arith.constant dense<0.000000e+00> : vector<256x128xf32>
    %2 = tpu.matmul %0, %1, %cst {dimension_numbers = #tpu.dot_dimension_numbers<[1], [0], [0], [1], [0, 0, 1, 1], [], []>} : vector<256x48xbf16>, vector<48x128xbf16>, vector<256x128xf32> -> vector<256x128xf32>
    %c0_3 = arith.constant 0 : index
    %c0_4 = arith.constant 0 : index
    %3 = vector.load %arg3[%c0_3, %c0_4] : memref<1x128xf32, #tpu.memory_space<vmem>>, vector<1x128xf32>
    %4 = vector.broadcast %3 : vector<1x128xf32> to vector<256x128xf32>
    %5 = arith.addf %2, %4 : vector<256x128xf32>
    %cst_5 = arith.constant dense<0.000000e+00> : vector<256xf32>
    %6 = vector.multi_reduction <add>, %5, %cst_5 [1] : vector<256x128xf32> to vector<256xf32>
    %7 = vector.shape_cast %6 : vector<256xf32> to vector<256x1xf32>
    %8 = arith.mulf %5, %5 : vector<256x128xf32>
    %cst_6 = arith.constant dense<0.000000e+00> : vector<256xf32>
    %9 = vector.multi_reduction <add>, %8, %cst_6 [1] : vector<256x128xf32> to vector<256xf32>
    %10 = vector.shape_cast %9 : vector<256xf32> to vector<256x1xf32>
    %cst_7 = arith.constant 7.812500e-03 : f32
    %11 = vector.broadcast %cst_7 : f32 to vector<256x1xf32>
    %12 = arith.mulf %7, %11 : vector<256x1xf32>
    %cst_8 = arith.constant 7.812500e-03 : f32
    %13 = vector.broadcast %cst_8 : f32 to vector<256x1xf32>
    %14 = arith.mulf %10, %13 : vector<256x1xf32>
    %15 = arith.mulf %12, %12 : vector<256x1xf32>
    %16 = arith.subf %14, %15 : vector<256x1xf32>
    %cst_9 = arith.constant 9.99999974E-6 : f32
    %17 = vector.broadcast %cst_9 : f32 to vector<256x1xf32>
    %18 = arith.addf %16, %17 : vector<256x1xf32>
    %19 = math.rsqrt %18 : vector<256x1xf32>
    %20 = vector.broadcast %12 : vector<256x1xf32> to vector<256x128xf32>
    %21 = arith.subf %5, %20 : vector<256x128xf32>
    %22 = vector.broadcast %19 : vector<256x1xf32> to vector<256x128xf32>
    %23 = arith.mulf %21, %22 : vector<256x128xf32>
    %c0_10 = arith.constant 0 : index
    %c0_11 = arith.constant 0 : index
    %24 = vector.load %arg4[%c0_10, %c0_11] : memref<1x128xf32, #tpu.memory_space<vmem>>, vector<1x128xf32>
    %25 = vector.broadcast %24 : vector<1x128xf32> to vector<256x128xf32>
    %26 = arith.mulf %23, %25 : vector<256x128xf32>
    %c0_12 = arith.constant 0 : index
    %c0_13 = arith.constant 0 : index
    %27 = vector.load %arg5[%c0_12, %c0_13] : memref<1x128xf32, #tpu.memory_space<vmem>>, vector<1x128xf32>
    %28 = vector.broadcast %27 : vector<1x128xf32> to vector<256x128xf32>
    %29 = arith.addf %26, %28 : vector<256x128xf32>
    %30 = arith.truncf %29 : vector<256x128xf32> to vector<256x128xbf16>
    %c0_14 = arith.constant 0 : index
    %c0_15 = arith.constant 0 : index
    %31 = vector.load %arg6[%c0_14, %c0_15] : memref<256x128xbf16, #tpu.memory_space<vmem>>, vector<256x128xbf16>
    tpu.vector_store %arg6[%c0_14, %c0_15], %30 {strides = array<i32>} : memref<256x128xbf16, #tpu.memory_space<vmem>>, vector<256x128xbf16>,
    return
  }
  func.func @transform_0(%arg0: i32) -> (i32, i32) {
    %c0_i32 = arith.constant 0 : i32
    %c0_i32_0 = arith.constant 0 : i32
    return %arg0, %c0_i32 : i32, i32
  }
  func.func @transform_1(%arg0: i32) -> (i32, i32) {
    %c0_i32 = arith.constant 0 : i32
    %c0_i32_0 = arith.constant 0 : i32
    %c0_i32_1 = arith.constant 0 : i32
    return %c0_i32, %c0_i32_0 : i32, i32
  }
  func.func @transform_2(%arg0: i32) -> (i32, i32) {
    %c0_i32 = arith.constant 0 : i32
    %c0_i32_0 = arith.constant 0 : i32
    %c0_i32_1 = arith.constant 0 : i32
    return %c0_i32, %c0_i32_0 : i32, i32
  }
  func.func @transform_3(%arg0: i32) -> (i32, i32) {
    %c0_i32 = arith.constant 0 : i32
    %c0_i32_0 = arith.constant 0 : i32
    %c0_i32_1 = arith.constant 0 : i32
    return %c0_i32, %c0_i32_0 : i32, i32
  }
  func.func @transform_4(%arg0: i32) -> (i32, i32) {
    %c0_i32 = arith.constant 0 : i32
    %c0_i32_0 = arith.constant 0 : i32
    %c0_i32_1 = arith.constant 0 : i32
    return %c0_i32, %c0_i32_0 : i32, i32
  }
  func.func @transform_5(%arg0: i32) -> (i32, i32) {
    %c0_i32 = arith.constant 0 : i32
    %c0_i32_0 = arith.constant 0 : i32
    return %arg0, %c0_i32 : i32, i32
  }
}

</mosaic_0001>

<llo_original>
// kernel: _lambda_.1
$region0: #{_lambda_.1}
  #allocation0 [shape = 'u32[]', space=smem, size = 0x4, offset = 0x4, fixed_abs, tag = 'smem constant byte address 0x4 - core index']
  #allocation1 [shape = 'u32[144,128]{1,0:T(1,128)}', space=vmem, size = 0x12000, scoped, tag = 'internal scratch']
  %s0 = inlined_call_operand.vmem [shape: bf16[512,48], index: 0, kind: input, shape index: {}]
  %s1 = inlined_call_operand.vmem [shape: bf16[48,128], index: 1, kind: input, shape index: {}]
  %s2 = inlined_call_operand.vmem [shape: f32[1,128], index: 2, kind: input, shape index: {}]
  %s3 = inlined_call_operand.vmem [shape: f32[1,128], index: 3, kind: input, shape index: {}]
  %s4 = inlined_call_operand.vmem [shape: f32[1,128], index: 4, kind: input, shape index: {}]
  %s5 = inlined_call_operand.hbm [shape: bf16[512,128], index: 5, kind: output, shape index: {}]
  %s6 = sld [smem:[#allocation0]]
  $region53: #{_lambda_.1} parent=0
    _
  %s8 = ssub.s32 1, %s6
  %s9 = scalar_select 0, %s8, %s6
  $region1: #{_lambda_.1} parent=0
    #allocation2 [shape = 'u8[131072]{0}', space=vmem, size = 0x20000, scoped, tag = 'output window, operand 0']
    #allocation3 [shape = 's32[2]{0}', space=sflag, size = 0x8, scoped, tag = 'scoped memory for _lambda_.1']
    %10 = vsyncpa [#allocation3], 0
    %s11 = scalar_lea.sflag [#allocation3], 1
    %12 = vsyncpa %s11, 0
    loop: start=0, step=1, limit=4
    $region2: #{_lambda_.1} parent=1 // loop_pre_header
      _
    $region3: #{_lambda_.1} parent=1 // loop_header
      %s14 = sphi 0, %s18
      %p15 = scmp.ge.s32.totalorder %s14, 4
      %s24 = sphi 0, %s26
      %s27 = sphi 0, %s24
      %s28 = sphi 0, %s27
      %s44 = sphi 0, %s28
      %s48 = sphi 0, %s48
      %s50 = sphi 0, %s48
      %s51 = sphi 0, %s50
      %s65 = sphi 0, %s51
      %s69 = sphi 0, %s69
      %s71 = sphi 0, %s69
      %s72 = sphi 0, %s71
      %s86 = sphi 0, %s72
      %s90 = sphi 0, %s90
      %s92 = sphi 0, %s90
      %s93 = sphi 0, %s92
      %s107 = sphi 0, %s93
      %s111 = sphi 0, %s111
      %s113 = sphi 0, %s111
      %s114 = sphi 0, %s113
      %s128 = sphi 0, %s114
      %s134 = sphi 0, %s136
      %s137 = sphi 0, %s134
      %s138 = sphi 0, %s137
      %s154 = sphi 0, %s138
    $region4: #{_lambda_.1} parent=1 // loop_header_branch
      %17 = sbr.rel (%p15) target = $region8
    $region5: #{_lambda_.1} parent=1 // loop_body
      %s19 = ssub.s32 %s14, 1
      %s20 = ssub.s32 %s14, 2
      %s21 = sadd.s32 %s14, 1
      %s22 = ssub.s32 %s14, %s21
      %p23 = scmp.eq.s32.totalorder %s22, 0
      %s25 = sadd.s32 %s24, 1
      %s26 = scalar_select %p23, %s24, %s25
      %p29 = pneg %p23
      %p30 = scmp.eq.s32.totalorder %s14, 1
      %p31 = por %p29, %p30
      %p32 = scmp.ne.s32.totalorder %s24, %s27
      %p33 = scmp.eq.s32.totalorder %s14, 0
      %p34 = por %p32, %p33
      %p35 = scmp.ne.s32.totalorder %s24, %s27
      %p36 = scmp.eq.s32.totalorder %s19, 1
      %p37 = por %p35, %p36
      %p38 = scmp.ne.s32.totalorder %s27, %s28
      %p39 = scmp.eq.s32.totalorder %s19, 0
      %p40 = por %p38, %p39
      %p41 = scmp.ne.s32.totalorder %s27, %s28
      %p42 = scmp.eq.s32.totalorder %s20, 1
      %p43 = por %p41, %p42
      %p45 = scmp.ne.s32.totalorder %s28, %s44
      %p46 = scmp.eq.s32.totalorder %s20, 0
      %p47 = por %p45, %p46
      %s49 = sadd.s32 %s48, 1
      %p52 = scmp.eq.s32.totalorder %s14, 1
      %p53 = scmp.ne.s32.totalorder %s48, %s50
      %p54 = scmp.eq.s32.totalorder %s14, 0
      %p55 = por %p53, %p54
      %p56 = scmp.ne.s32.totalorder %s48, %s50
      %p57 = scmp.eq.s32.totalorder %s19, 1
      %p58 = por %p56, %p57
      %p59 = scmp.ne.s32.totalorder %s50, %s51
      %p60 = scmp.eq.s32.totalorder %s19, 0
      %p61 = por %p59, %p60
      %p62 = scmp.ne.s32.totalorder %s50, %s51
      %p63 = scmp.eq.s32.totalorder %s20, 1
      %p64 = por %p62, %p63
      %p66 = scmp.ne.s32.totalorder %s51, %s65
      %p67 = scmp.eq.s32.totalorder %s20, 0
      %p68 = por %p66, %p67
      %s70 = sadd.s32 %s69, 1
      %p73 = scmp.eq.s32.totalorder %s14, 1
      %p74 = scmp.ne.s32.totalorder %s69, %s71
      %p75 = scmp.eq.s32.totalorder %s14, 0
      %p76 = por %p74, %p75
      %p77 = scmp.ne.s32.totalorder %s69, %s71
      %p78 = scmp.eq.s32.totalorder %s19, 1
      %p79 = por %p77, %p78
      %p80 = scmp.ne.s32.totalorder %s71, %s72
      %p81 = scmp.eq.s32.totalorder %s19, 0
      %p82 = por %p80, %p81
      %p83 = scmp.ne.s32.totalorder %s71, %s72
      %p84 = scmp.eq.s32.totalorder %s20, 1
      %p85 = por %p83, %p84
      %p87 = scmp.ne.s32.totalorder %s72, %s86
      %p88 = scmp.eq.s32.totalorder %s20, 0
      %p89 = por %p87, %p88
      %s91 = sadd.s32 %s90, 1
      %p94 = scmp.eq.s32.totalorder %s14, 1
      %p95 = scmp.ne.s32.totalorder %s90, %s92
      %p96 = scmp.eq.s32.totalorder %s14, 0
      %p97 = por %p95, %p96
      %p98 = scmp.ne.s32.totalorder %s90, %s92
      %p99 = scmp.eq.s32.totalorder %s19, 1
      %p100 = por %p98, %p99
      %p101 = scmp.ne.s32.totalorder %s92, %s93
      %p102 = scmp.eq.s32.totalorder %s19, 0
      %p103 = por %p101, %p102
      %p104 = scmp.ne.s32.totalorder %s92, %s93
      %p105 = scmp.eq.s32.totalorder %s20, 1
      %p106 = por %p104, %p105
      %p108 = scmp.ne.s32.totalorder %s93, %s107
      %p109 = scmp.eq.s32.totalorder %s20, 0
      %p110 = por %p108, %p109
      %s112 = sadd.s32 %s111, 1
      %p115 = scmp.eq.s32.totalorder %s14, 1
      %p116 = scmp.ne.s32.totalorder %s111, %s113
      %p117 = scmp.eq.s32.totalorder %s14, 0
      %p118 = por %p116, %p117
      %p119 = scmp.ne.s32.totalorder %s111, %s113
      %p120 = scmp.eq.s32.totalorder %s19, 1
      %p121 = por %p119, %p120
      %p122 = scmp.ne.s32.totalorder %s113, %s114
      %p123 = scmp.eq.s32.totalorder %s19, 0
      %p124 = por %p122, %p123
      %p125 = scmp.ne.s32.totalorder %s113, %s114
      %p126 = scmp.eq.s32.totalorder %s20, 1
      %p127 = por %p125, %p126
      %p129 = scmp.ne.s32.totalorder %s114, %s128
      %p130 = scmp.eq.s32.totalorder %s20, 0
      %p131 = por %p129, %p130
      %s132 = ssub.s32 %s14, %s21
      %p133 = scmp.eq.s32.totalorder %s132, 0
      %s135 = sadd.s32 %s134, 1
      %s136 = scalar_select %p133, %s134, %s135
      %p139 = pneg %p133
      %p140 = scmp.eq.s32.totalorder %s14, 1
      %p141 = por %p139, %p140
      %p142 = scmp.ne.s32.totalorder %s134, %s137
      %p143 = scmp.eq.s32.totalorder %s14, 0
      %p144 = por %p142, %p143
      %p145 = scmp.ne.s32.totalorder %s134, %s137
      %p146 = scmp.eq.s32.totalorder %s19, 1
      %p147 = por %p145, %p146
      %p148 = scmp.ne.s32.totalorder %s137, %s138
      %p149 = scmp.eq.s32.totalorder %s19, 0
      %p150 = por %p148, %p149
      %p151 = scmp.ne.s32.totalorder %s137, %s138
      %p152 = scmp.eq.s32.totalorder %s20, 1
      %p153 = por %p151, %p152
      %p155 = scmp.ne.s32.totalorder %s138, %s154
      %p156 = scmp.eq.s32.totalorder %s20, 0
      %p157 = por %p155, %p156
      %p158 = scmp.le.s32.totalorder 1, %s14
      %p159 = scmp.lt.s32.totalorder %s14, 3
      %p160 = pnand %p158, %p159
      %p161 = pneg %p160
      // Predicated region
      $region9: #{_lambda_.1} parent=5 // pred_check
        _
      $region10: #{_lambda_.1} parent=5 // pred_check_branch
        %163 = sbr.rel (%p160) target = $region12
      $region11: #{_lambda_.1} parent=5 // pred_region
        %s164 = ssub.s32 %s14, 1
        // Predicated region
        $region13: #{_lambda_.1} parent=11 // pred_check
          %p165 = pneg %p61
        $region14: #{_lambda_.1} parent=11 // pred_check_branch
          %167 = sbr.rel (%p165) target = $region16
        $region15: #{_lambda_.1} parent=11 // pred_region
          _
        $region16: #{_lambda_.1} parent=11 // pred_fallthru
          _
        // Predicated region
        $region17: #{_lambda_.1} parent=11 // pred_check
          %p168 = pneg %p82
        $region18: #{_lambda_.1} parent=11 // pred_check_branch
          %170 = sbr.rel (%p168) target = $region20
        $region19: #{_lambda_.1} parent=11 // pred_region
          _
        $region20: #{_lambda_.1} parent=11 // pred_fallthru
          _
        // Predicated region
        $region21: #{_lambda_.1} parent=11 // pred_check
          %p171 = pneg %p103
        $region22: #{_lambda_.1} parent=11 // pred_check_branch
          %173 = sbr.rel (%p171) target = $region24
        $region23: #{_lambda_.1} parent=11 // pred_region
          _
        $region24: #{_lambda_.1} parent=11 // pred_fallthru
          _
        // Predicated region
        $region25: #{_lambda_.1} parent=11 // pred_check
          %p174 = pneg %p124
        $region26: #{_lambda_.1} parent=11 // pred_check_branch
          %176 = sbr.rel (%p174) target = $region28
        $region27: #{_lambda_.1} parent=11 // pred_region
          _
        $region28: #{_lambda_.1} parent=11 // pred_fallthru
          _
      $region12: #{_lambda_.1} parent=5 // pred_fallthru
        _
      %p177 = scmp.lt.s32.totalorder %s14, 2
      // Predicated region
      $region29: #{_lambda_.1} parent=5 // pred_check
        %p178 = pneg %p177
      $region30: #{_lambda_.1} parent=5 // pred_check_branch
        %180 = sbr.rel (%p178) target = $region32
      $region31: #{_lambda_.1} parent=5 // pred_region
        // Predicated region
        $region33: #{_lambda_.1} parent=31 // pred_check
          %p181 = pneg %p34
        $region34: #{_lambda_.1} parent=31 // pred_check_branch
          %183 = sbr.rel (%p181) target = $region36
        $region35: #{_lambda_.1} parent=31 // pred_region
          %s184 = smul.u32 32, %s14
          %p185 = scmp.lt.s32.totalorder %s184, 63
          %s186 = scalar_select %p185, %s184, 63
          %s187 = smul.addr %s186, 4
          %s188 = scalar_lea.vmem %s0, %s187
          %s189 = smul.u32 32, %s14
        $region36: #{_lambda_.1} parent=31 // pred_fallthru
          _
      $region32: #{_lambda_.1} parent=5 // pred_fallthru
        _
      %p190 = scmp.le.s32.totalorder 1, %s14
      %p191 = scmp.lt.s32.totalorder %s14, 3
      %p192 = pnand %p190, %p191
      %p193 = pneg %p192
      // Predicated region
      $region37: #{_lambda_.1} parent=5 // pred_check
        _
      $region38: #{_lambda_.1} parent=5 // pred_check_branch
        %195 = sbr.rel (%p192) target = $region40
      $region39: #{_lambda_.1} parent=5 // pred_region
        %s196 = ssub.s32 %s14, 1
        %s197 = smul.u32 32, %s19
        %p198 = scmp.lt.s32.totalorder %s197, 63
        %s199 = scalar_select %p198, %s197, 63
        %s200 = smul.addr %s199, 4
        %s201 = scalar_lea.vmem %s0, %s200
        %p202 = pneg %p40
        %p203 = pneg %p37
        %p204 = pneg %p61
        %p205 = pneg %p58
        %p206 = pneg %p82
        %p207 = pneg %p79
        %p208 = pneg %p103
        %p209 = pneg %p100
        %p210 = pneg %p124
        %p211 = pneg %p121
        %p212 = pneg %p150
        %p213 = pneg %p147
        %s214 = sand.u32 %s137, 1
        %s215 = scalar_lea.sflag [#allocation3], %s214
        %s216 = sand.u32 %s137, 1
        %s217 = smul.addr %s216, 128
        %s218 = scalar_lea.vmem [#allocation2], %s217
        %s219 = smul.u32 32, %s19
        %p220 = scmp.lt.s32.totalorder %s219, 63
        %s221 = scalar_select %p220, %s219, 63
        %s222 = smul.addr %s221, 4
        %s223 = scalar_lea.vmem %s0, %s222
        %s224 = smul.u32 32, %s19
        %s225 = smul.u32 32, %s19
        %v227 = vld [vmem:[%s223] sm:$0xf]
        %v228 = vld [vmem:[%s223 + $0x4] sm:$0xf]
        %v229 = vld [vmem:[%s223 + $0x8] sm:$0xf]
        %v230 = vld [vmem:[%s223 + $0xc] sm:$0xf]
        %v231 = vld [vmem:[%s223 + $0x10] sm:$0xf]
        %v232 = vld [vmem:[%s223 + $0x14] sm:$0xf]
        %v233 = vld [vmem:[%s223 + $0x18] sm:$0xf]
        %v234 = vld [vmem:[%s223 + $0x1c] sm:$0xf]
        %v235 = vld [vmem:[%s223 + $0x20] sm:$0xf]
        %v236 = vld [vmem:[%s223 + $0x24] sm:$0xf]
        %v237 = vld [vmem:[%s223 + $0x28] sm:$0xf]
        %v238 = vld [vmem:[%s223 + $0x2c] sm:$0xf]
        %v239 = vld [vmem:[%s223 + $0x30] sm:$0xf]
        %v240 = vld [vmem:[%s223 + $0x34] sm:$0xf]
        %v241 = vld [vmem:[%s223 + $0x38] sm:$0xf]
        %v242 = vld [vmem:[%s223 + $0x3c] sm:$0xf]
        %v243 = vld [vmem:[%s223 + $0x40] sm:$0xf]
        %v244 = vld [vmem:[%s223 + $0x44] sm:$0xf]
        %v245 = vld [vmem:[%s223 + $0x48] sm:$0xf]
        %v246 = vld [vmem:[%s223 + $0x4c] sm:$0xf]
        %v247 = vld [vmem:[%s223 + $0x50] sm:$0xf]
        %v248 = vld [vmem:[%s223 + $0x54] sm:$0xf]
        %v249 = vld [vmem:[%s223 + $0x58] sm:$0xf]
        %v250 = vld [vmem:[%s223 + $0x5c] sm:$0xf]
        %v251 = vld [vmem:[%s223 + $0x60] sm:$0xf]
        %v252 = vld [vmem:[%s223 + $0x64] sm:$0xf]
        %v253 = vld [vmem:[%s223 + $0x68] sm:$0xf]
        %v254 = vld [vmem:[%s223 + $0x6c] sm:$0xf]
        %v255 = vld [vmem:[%s223 + $0x70] sm:$0xf]
        %v256 = vld [vmem:[%s223 + $0x74] sm:$0xf]
        %v257 = vld [vmem:[%s223 + $0x78] sm:$0xf]
        %v258 = vld [vmem:[%s223 + $0x7c] sm:$0xf]
        %v259 = vld [vmem:[%s1] sm:$0xf]
        %v260 = vld [vmem:[%s1 + $0x4] sm:$0xf]
        %v261 = vld [vmem:[%s1 + $0x8] sm:$0xf]
        %v262 = vld [vmem:[%s1 + $0xc] sm:$0xf]
        %v263 = vld [vmem:[%s1 + $0x10] sm:$0xf]
        %v264 = vld [vmem:[%s1 + $0x14] sm:$0xf]
        %v265 = vld [vmem:[%s2] sm:$0x1]
        %v267 = vlaneseq
        %v268 = vshrl.u32 %v267, 7
        %v269 = vsub.s32 0, %v268
        %v270 = vrot.slane %v265, %v269
        %v304 = vunpack.c.l.b16 %v227
        %v305 = vunpack.c.l.b16 %v228
        %v306 = vunpack.c.l.b16 %v229
        %v307 = vunpack.c.l.b16 %v230
        %v308 = vunpack.c.l.b16 %v231
        %v309 = vunpack.c.l.b16 %v232
        %v310 = vunpack.c.l.b16 %v233
        %v311 = vunpack.c.l.b16 %v234
        %v312 = vunpack.c.l.b16 %v235
        %v313 = vunpack.c.l.b16 %v236
        %v314 = vunpack.c.l.b16 %v237
        %v315 = vunpack.c.l.b16 %v238
        %v316 = vunpack.c.l.b16 %v239
        %v317 = vunpack.c.l.b16 %v240
        %v318 = vunpack.c.l.b16 %v241
        %v319 = vunpack.c.l.b16 %v242
        %v320 = vunpack.c.l.b16 %v243
        %v321 = vunpack.c.l.b16 %v244
        %v322 = vunpack.c.l.b16 %v245
        %v323 = vunpack.c.l.b16 %v246
        %v324 = vunpack.c.l.b16 %v247
        %v325 = vunpack.c.l.b16 %v248
        %v326 = vunpack.c.l.b16 %v249
        %v327 = vunpack.c.l.b16 %v250
        %v328 = vunpack.c.l.b16 %v251
        %v329 = vunpack.c.l.b16 %v252
        %v330 = vunpack.c.l.b16 %v253
        %v331 = vunpack.c.l.b16 %v254
        %v332 = vunpack.c.l.b16 %v255
        %v333 = vunpack.c.l.b16 %v256
        %v334 = vunpack.c.l.b16 %v257
        %v335 = vunpack.c.l.b16 %v258
        %v336 = vpack.c.b16 %v305, %v304
        %v337 = vpack.c.b16 %v307, %v306
        %v338 = vpack.c.b16 %v309, %v308
        %v339 = vpack.c.b16 %v311, %v310
        %v340 = vpack.c.b16 %v313, %v312
        %v341 = vpack.c.b16 %v315, %v314
        %v342 = vpack.c.b16 %v317, %v316
        %v343 = vpack.c.b16 %v319, %v318
        %v344 = vpack.c.b16 %v321, %v320
        %v345 = vpack.c.b16 %v323, %v322
        %v346 = vpack.c.b16 %v325, %v324
        %v347 = vpack.c.b16 %v327, %v326
        %v348 = vpack.c.b16 %v329, %v328
        %v349 = vpack.c.b16 %v331, %v330
        %v350 = vpack.c.b16 %v333, %v332
        %v351 = vpack.c.b16 %v335, %v334
        %v358 = vunpack.c.l.b16 %v259
        %v359 = vunpack.c.l.b16 %v260
        %v360 = vunpack.c.l.b16 %v261
        %v361 = vunpack.c.l.b16 %v262
        %v362 = vunpack.c.l.b16 %v263
        %v363 = vunpack.c.l.b16 %v264
        %v364 = vpack.c.b16 %v359, %v358
        %v365 = vpack.c.b16 %v361, %v360
        %v366 = vpack.c.b16 %v363, %v362
        %vm370 = vcmask 392192
        %v372 = vsel %vm370, %v336, 0
        %v375 = vsel %vm370, %v337, 0
        %v378 = vsel %vm370, %v338, 0
        %v381 = vsel %vm370, %v339, 0
        %v384 = vsel %vm370, %v340, 0
        %v387 = vsel %vm370, %v341, 0
        %v390 = vsel %vm370, %v342, 0
        %v393 = vsel %vm370, %v343, 0
        %v396 = vsel %vm370, %v344, 0
        %v399 = vsel %vm370, %v345, 0
        %v402 = vsel %vm370, %v346, 0
        %v405 = vsel %vm370, %v347, 0
        %v408 = vsel %vm370, %v348, 0
        %v411 = vsel %vm370, %v349, 0
        %v414 = vsel %vm370, %v350, 0
        %v417 = vsel %vm370, %v351, 0
        %419 = vmatprep.subr.bf16.mxu0 0
        %420 = vmatpush1.bf16.msra.mxu0 %v364
        %421 = vmatprep.subr.bf16.mxu0 0
        %422 = vmatpush1.bf16.msra.mxu0 %v365
        %423 = vmatprep.subr.bf16.mxu0 0
        %424 = vmatpush1.bf16.msra.mxu0 %v366
        %425 = vmatprep.subr.bf16.mxu0 0
        %426 = vmatpush1.bf16.msra.mxu0 0
        %427 = vmatprep.subr.bf16.mxu0 0
        %428 = vmatpush1.bf16.msra.mxu0 0
        %429 = vmatprep.subr.bf16.mxu0 0
        %430 = vmatpush1.bf16.msra.mxu0 0
        %431 = vmatprep.subr.bf16.mxu0 0
        %432 = vmatpush1.bf16.msra.mxu0 0
        %433 = vmatprep.subr.bf16.mxu0 0
        %434 = vmatpush1.bf16.msra.mxu0 0
        %435 = vmatprep.subr.bf16.mxu0 0
        %436 = vmatpush1.bf16.msra.mxu0 0
        %437 = vmatprep.subr.bf16.mxu0 0
        %438 = vmatpush1.bf16.msra.mxu0 0
        %439 = vmatprep.subr.bf16.mxu0 0
        %440 = vmatpush1.bf16.msra.mxu0 0
        %441 = vmatprep.subr.bf16.mxu0 0
        %442 = vmatpush1.bf16.msra.mxu0 0
        %443 = vmatprep.subr.bf16.mxu0 0
        %444 = vmatpush1.bf16.msra.mxu0 0
        %445 = vmatprep.subr.bf16.mxu0 0
        %446 = vmatpush1.bf16.msra.mxu0 0
        %447 = vmatprep.subr.bf16.mxu0 0
        %448 = vmatpush1.bf16.msra.mxu0 0
        %449 = vmatprep.subr.bf16.mxu0 0
        %450 = vmatpush1.bf16.msra.mxu0 0
        %451 = vmatprep.mubr.bf16.mxu0 0
        %452 = vmatmul.mubr.bf16.gmra.mrb[0].mxu0 %v372
        %v453 = vpop.f32.mrb[0].mxu0
        %v454 = vadd.f32 %v270, %v453
        %v455 = vpop.f32.mrb[0].mxu0
        %v456 = vpop.f32.mrb[0].mxu0
        %v457 = vadd.f32 %v270, %v456
        %v458 = vpop.f32.mrb[0].mxu0
        %459 = vmatprep.mubr.bf16.mxu0 0
        %460 = vmatmul.mubr.bf16.gmra.mrb[0].mxu0 %v375
        %v461 = vpop.f32.mrb[0].mxu0
        %v462 = vadd.f32 %v270, %v461
        %v463 = vpop.f32.mrb[0].mxu0
        %v464 = vpop.f32.mrb[0].mxu0
        %v465 = vadd.f32 %v270, %v464
        %v466 = vpop.f32.mrb[0].mxu0
        %467 = vmatprep.mubr.bf16.mxu0 0
        %468 = vmatmul.mubr.bf16.gmra.mrb[0].mxu0 %v378
        %v469 = vpop.f32.mrb[0].mxu0
        %v470 = vadd.f32 %v270, %v469
        %v471 = vpop.f32.mrb[0].mxu0
        %v472 = vpop.f32.mrb[0].mxu0
        %v473 = vadd.f32 %v270, %v472
        %v474 = vpop.f32.mrb[0].mxu0
        %475 = vmatprep.mubr.bf16.mxu0 0
        %476 = vmatmul.mubr.bf16.gmra.mrb[0].mxu0 %v381
        %v477 = vpop.f32.mrb[0].mxu0
        %v478 = vadd.f32 %v270, %v477
        %v479 = vpop.f32.mrb[0].mxu0
        %v480 = vpop.f32.mrb[0].mxu0
        %v481 = vadd.f32 %v270, %v480
        %v482 = vpop.f32.mrb[0].mxu0
        %483 = vmatprep.mubr.bf16.mxu0 0
        %484 = vmatmul.mubr.bf16.gmra.mrb[0].mxu0 %v384
        %v485 = vpop.f32.mrb[0].mxu0
        %v486 = vadd.f32 %v270, %v485
        %v487 = vpop.f32.mrb[0].mxu0
        %v488 = vpop.f32.mrb[0].mxu0
        %v489 = vadd.f32 %v270, %v488
        %v490 = vpop.f32.mrb[0].mxu0
        %491 = vmatprep.mubr.bf16.mxu0 0
        %492 = vmatmul.mubr.bf16.gmra.mrb[0].mxu0 %v387
        %v493 = vpop.f32.mrb[0].mxu0
        %v494 = vadd.f32 %v270, %v493
        %v495 = vpop.f32.mrb[0].mxu0
        %v496 = vpop.f32.mrb[0].mxu0
        %v497 = vadd.f32 %v270, %v496
        %v498 = vpop.f32.mrb[0].mxu0
        %499 = vmatprep.mubr.bf16.mxu0 0
        %500 = vmatmul.mubr.bf16.gmra.mrb[0].mxu0 %v390
        %v501 = vpop.f32.mrb[0].mxu0
        %v502 = vadd.f32 %v270, %v501
        %v503 = vpop.f32.mrb[0].mxu0
        %v504 = vpop.f32.mrb[0].mxu0
        %v505 = vadd.f32 %v270, %v504
        %v506 = vpop.f32.mrb[0].mxu0
        %507 = vmatprep.mubr.bf16.mxu0 0
        %508 = vmatmul.mubr.bf16.gmra.mrb[0].mxu0 %v393
        %v509 = vpop.f32.mrb[0].mxu0
        %v510 = vadd.f32 %v270, %v509
        %v511 = vpop.f32.mrb[0].mxu0
        %v512 = vpop.f32.mrb[0].mxu0
        %v513 = vadd.f32 %v270, %v512
        %v514 = vpop.f32.mrb[0].mxu0
        %515 = vmatprep.mubr.bf16.mxu0 0
        %516 = vmatmul.mubr.bf16.gmra.mrb[0].mxu0 %v396
        %v517 = vpop.f32.mrb[0].mxu0
        %v518 = vadd.f32 %v270, %v517
        %v519 = vpop.f32.mrb[0].mxu0
        %v520 = vpop.f32.mrb[0].mxu0
        %v521 = vadd.f32 %v270, %v520
        %v522 = vpop.f32.mrb[0].mxu0
        %523 = vmatprep.mubr.bf16.mxu0 0
        %524 = vmatmul.mubr.bf16.gmra.mrb[0].mxu0 %v399
        %v525 = vpop.f32.mrb[0].mxu0
        %v526 = vadd.f32 %v270, %v525
        %v527 = vpop.f32.mrb[0].mxu0
        %v528 = vpop.f32.mrb[0].mxu0
        %v529 = vadd.f32 %v270, %v528
        %v530 = vpop.f32.mrb[0].mxu0
        %531 = vmatprep.mubr.bf16.mxu0 0
        %532 = vmatmul.mubr.bf16.gmra.mrb[0].mxu0 %v402
        %v533 = vpop.f32.mrb[0].mxu0
        %v534 = vadd.f32 %v270, %v533
        %v535 = vpop.f32.mrb[0].mxu0
        %v536 = vpop.f32.mrb[0].mxu0
        %v537 = vadd.f32 %v270, %v536
        %v538 = vpop.f32.mrb[0].mxu0
        %539 = vmatprep.mubr.bf16.mxu0 0
        %540 = vmatmul.mubr.bf16.gmra.mrb[0].mxu0 %v405
        %v541 = vpop.f32.mrb[0].mxu0
        %v542 = vadd.f32 %v270, %v541
        %v543 = vpop.f32.mrb[0].mxu0
        %v544 = vpop.f32.mrb[0].mxu0
        %v545 = vadd.f32 %v270, %v544
        %v546 = vpop.f32.mrb[0].mxu0
        %547 = vmatprep.mubr.bf16.mxu0 0
        %548 = vmatmul.mubr.bf16.gmra.mrb[0].mxu0 %v408
        %v549 = vpop.f32.mrb[0].mxu0
        %v550 = vadd.f32 %v270, %v549
        %v551 = vpop.f32.mrb[0].mxu0
        %v552 = vpop.f32.mrb[0].mxu0
        %v553 = vadd.f32 %v270, %v552
        %v554 = vpop.f32.mrb[0].mxu0
        %555 = vmatprep.mubr.bf16.mxu0 0
        %556 = vmatmul.mubr.bf16.gmra.mrb[0].mxu0 %v411
        %v557 = vpop.f32.mrb[0].mxu0
        %v558 = vadd.f32 %v270, %v557
        %v559 = vpop.f32.mrb[0].mxu0
        %v560 = vpop.f32.mrb[0].mxu0
        %v561 = vadd.f32 %v270, %v560
        %v562 = vpop.f32.mrb[0].mxu0
        %563 = vmatprep.mubr.bf16.mxu0 0
        %564 = vmatmul.mubr.bf16.gmra.mrb[0].mxu0 %v414
        %v565 = vpop.f32.mrb[0].mxu0
        %v566 = vadd.f32 %v270, %v565
        %v567 = vpop.f32.mrb[0].mxu0
        %v568 = vpop.f32.mrb[0].mxu0
        %v569 = vadd.f32 %v270, %v568
        %v570 = vpop.f32.mrb[0].mxu0
        %571 = vmatprep.mubr.bf16.mxu0 0
        %572 = vmatmul.mubr.bf16.gmra.mrb[0].mxu0 %v417
        %v573 = vpop.f32.mrb[0].mxu0
        %v574 = vadd.f32 %v270, %v573
        %v575 = vpop.f32.mrb[0].mxu0
        %v576 = vpop.f32.mrb[0].mxu0
        %v577 = vadd.f32 %v270, %v576
        %v578 = vpop.f32.mrb[0].mxu0
        %579 = vdwg.mxu0
        %580 = vadd.xlane.f32.xlu0 %v454
        %v581 = vpop.xlane.xlu0 %580
        %582 = vadd.xlane.f32.xlu0 %v457
        %v583 = vpop.xlane.xlu0 %582
        %584 = vadd.xlane.f32.xlu0 %v462
        %v585 = vpop.xlane.xlu0 %584
        %586 = vadd.xlane.f32.xlu0 %v465
        %v587 = vpop.xlane.xlu0 %586
        %588 = vadd.xlane.f32.xlu0 %v470
        %v589 = vpop.xlane.xlu0 %588
        %590 = vadd.xlane.f32.xlu0 %v473
        %v591 = vpop.xlane.xlu0 %590
        %592 = vadd.xlane.f32.xlu0 %v478
        %v593 = vpop.xlane.xlu0 %592
        %594 = vadd.xlane.f32.xlu0 %v481
        %v595 = vpop.xlane.xlu0 %594
        %596 = vadd.xlane.f32.xlu0 %v486
        %v597 = vpop.xlane.xlu0 %596
        %598 = vadd.xlane.f32.xlu0 %v489
        %v599 = vpop.xlane.xlu0 %598
        %600 = vadd.xlane.f32.xlu0 %v494
        %v601 = vpop.xlane.xlu0 %600
        %602 = vadd.xlane.f32.xlu0 %v497
        %v603 = vpop.xlane.xlu0 %602
        %604 = vadd.xlane.f32.xlu0 %v502
        %v605 = vpop.xlane.xlu0 %604
        %606 = vadd.xlane.f32.xlu0 %v505
        %v607 = vpop.xlane.xlu0 %606
        %608 = vadd.xlane.f32.xlu0 %v510
        %v609 = vpop.xlane.xlu0 %608
        %610 = vadd.xlane.f32.xlu0 %v513
        %v611 = vpop.xlane.xlu0 %610
        %612 = vadd.xlane.f32.xlu0 %v518
        %v613 = vpop.xlane.xlu0 %612
        %614 = vadd.xlane.f32.xlu0 %v521
        %v615 = vpop.xlane.xlu0 %614
        %616 = vadd.xlane.f32.xlu0 %v526
        %v617 = vpop.xlane.xlu0 %616
        %618 = vadd.xlane.f32.xlu0 %v529
        %v619 = vpop.xlane.xlu0 %618
        %620 = vadd.xlane.f32.xlu0 %v534
        %v621 = vpop.xlane.xlu0 %620
        %622 = vadd.xlane.f32.xlu0 %v537
        %v623 = vpop.xlane.xlu0 %622
        %624 = vadd.xlane.f32.xlu0 %v542
        %v625 = vpop.xlane.xlu0 %624
        %626 = vadd.xlane.f32.xlu0 %v545
        %v627 = vpop.xlane.xlu0 %626
        %628 = vadd.xlane.f32.xlu0 %v550
        %v629 = vpop.xlane.xlu0 %628
        %630 = vadd.xlane.f32.xlu0 %v553
        %v631 = vpop.xlane.xlu0 %630
        %632 = vadd.xlane.f32.xlu0 %v558
        %v633 = vpop.xlane.xlu0 %632
        %634 = vadd.xlane.f32.xlu0 %v561
        %v635 = vpop.xlane.xlu0 %634
        %636 = vadd.xlane.f32.xlu0 %v566
        %v637 = vpop.xlane.xlu0 %636
        %638 = vadd.xlane.f32.xlu0 %v569
        %v639 = vpop.xlane.xlu0 %638
        %640 = vadd.xlane.f32.xlu0 %v574
        %v641 = vpop.xlane.xlu0 %640
        %642 = vadd.xlane.f32.xlu0 %v577
        %v643 = vpop.xlane.xlu0 %642
        %v644 = vmul.f32 %v454, %v454
        %v645 = vmul.f32 %v457, %v457
        %v646 = vmul.f32 %v462, %v462
        %v647 = vmul.f32 %v465, %v465
        %v648 = vmul.f32 %v470, %v470
        %v649 = vmul.f32 %v473, %v473
        %v650 = vmul.f32 %v478, %v478
        %v651 = vmul.f32 %v481, %v481
        %v652 = vmul.f32 %v486, %v486
        %v653 = vmul.f32 %v489, %v489
        %v654 = vmul.f32 %v494, %v494
        %v655 = vmul.f32 %v497, %v497
        %v656 = vmul.f32 %v502, %v502
        %v657 = vmul.f32 %v505, %v505
        %v658 = vmul.f32 %v510, %v510
        %v659 = vmul.f32 %v513, %v513
        %v660 = vmul.f32 %v518, %v518
        %v661 = vmul.f32 %v521, %v521
        %v662 = vmul.f32 %v526, %v526
        %v663 = vmul.f32 %v529, %v529
        %v664 = vmul.f32 %v534, %v534
        %v665 = vmul.f32 %v537, %v537
        %v666 = vmul.f32 %v542, %v542
        %v667 = vmul.f32 %v545, %v545
        %v668 = vmul.f32 %v550, %v550
        %v669 = vmul.f32 %v553, %v553
        %v670 = vmul.f32 %v558, %v558
        %v671 = vmul.f32 %v561, %v561
        %v672 = vmul.f32 %v566, %v566
        %v673 = vmul.f32 %v569, %v569
        %v674 = vmul.f32 %v574, %v574
        %v675 = vmul.f32 %v577, %v577
        %676 = vadd.xlane.f32.xlu0 %v644
        %v677 = vpop.xlane.xlu0 %676
        %678 = vadd.xlane.f32.xlu0 %v645
        %v679 = vpop.xlane.xlu0 %678
        %680 = vadd.xlane.f32.xlu0 %v646
        %v681 = vpop.xlane.xlu0 %680
        %682 = vadd.xlane.f32.xlu0 %v647
        %v683 = vpop.xlane.xlu0 %682
        %684 = vadd.xlane.f32.xlu0 %v648
        %v685 = vpop.xlane.xlu0 %684
        %686 = vadd.xlane.f32.xlu0 %v649
        %v687 = vpop.xlane.xlu0 %686
        %688 = vadd.xlane.f32.xlu0 %v650
        %v689 = vpop.xlane.xlu0 %688
        %690 = vadd.xlane.f32.xlu0 %v651
        %v691 = vpop.xlane.xlu0 %690
        %692 = vadd.xlane.f32.xlu0 %v652
        %v693 = vpop.xlane.xlu0 %692
        %694 = vadd.xlane.f32.xlu0 %v653
        %v695 = vpop.xlane.xlu0 %694
        %696 = vadd.xlane.f32.xlu0 %v654
        %v697 = vpop.xlane.xlu0 %696
        %698 = vadd.xlane.f32.xlu0 %v655
        %v699 = vpop.xlane.xlu0 %698
        %700 = vadd.xlane.f32.xlu0 %v656
        %v701 = vpop.xlane.xlu0 %700
        %702 = vadd.xlane.f32.xlu0 %v657
        %v703 = vpop.xlane.xlu0 %702
        %704 = vadd.xlane.f32.xlu0 %v658
        %v705 = vpop.xlane.xlu0 %704
        %706 = vadd.xlane.f32.xlu0 %v659
        %v707 = vpop.xlane.xlu0 %706
        %708 = vadd.xlane.f32.xlu0 %v660
        %v709 = vpop.xlane.xlu0 %708
        %710 = vadd.xlane.f32.xlu0 %v661
        %v711 = vpop.xlane.xlu0 %710
        %712 = vadd.xlane.f32.xlu0 %v662
        %v713 = vpop.xlane.xlu0 %712
        %714 = vadd.xlane.f32.xlu0 %v663
        %v715 = vpop.xlane.xlu0 %714
        %716 = vadd.xlane.f32.xlu0 %v664
        %v717 = vpop.xlane.xlu0 %716
        %718 = vadd.xlane.f32.xlu0 %v665
        %v719 = vpop.xlane.xlu0 %718
        %720 = vadd.xlane.f32.xlu0 %v666
        %v721 = vpop.xlane.xlu0 %720
        %722 = vadd.xlane.f32.xlu0 %v667
        %v723 = vpop.xlane.xlu0 %722
        %724 = vadd.xlane.f32.xlu0 %v668
        %v725 = vpop.xlane.xlu0 %724
        %726 = vadd.xlane.f32.xlu0 %v669
        %v727 = vpop.xlane.xlu0 %726
        %728 = vadd.xlane.f32.xlu0 %v670
        %v729 = vpop.xlane.xlu0 %728
        %730 = vadd.xlane.f32.xlu0 %v671
        %v731 = vpop.xlane.xlu0 %730
        %732 = vadd.xlane.f32.xlu0 %v672
        %v733 = vpop.xlane.xlu0 %732
        %734 = vadd.xlane.f32.xlu0 %v673
        %v735 = vpop.xlane.xlu0 %734
        %736 = vadd.xlane.f32.xlu0 %v674
        %v737 = vpop.xlane.xlu0 %736
        %738 = vadd.xlane.f32.xlu0 %v675
        %v739 = vpop.xlane.xlu0 %738
        %v740 = vmul.f32 %v581, 0.0078125
        %v741 = vmul.f32 %v583, 0.0078125
        %v742 = vmul.f32 %v585, 0.0078125
        %v743 = vmul.f32 %v587, 0.0078125
        %v744 = vmul.f32 %v589, 0.0078125
        %v745 = vmul.f32 %v591, 0.0078125
        %v746 = vmul.f32 %v593, 0.0078125
        %v747 = vmul.f32 %v595, 0.0078125
        %v748 = vmul.f32 %v597, 0.0078125
        %v749 = vmul.f32 %v599, 0.0078125
        %v750 = vmul.f32 %v601, 0.0078125
        %v751 = vmul.f32 %v603, 0.0078125
        %v752 = vmul.f32 %v605, 0.0078125
        %v753 = vmul.f32 %v607, 0.0078125
        %v754 = vmul.f32 %v609, 0.0078125
        %v755 = vmul.f32 %v611, 0.0078125
        %v756 = vmul.f32 %v613, 0.0078125
        %v757 = vmul.f32 %v615, 0.0078125
        %v758 = vmul.f32 %v617, 0.0078125
        %v759 = vmul.f32 %v619, 0.0078125
        %v760 = vmul.f32 %v621, 0.0078125
        %v761 = vmul.f32 %v623, 0.0078125
        %v762 = vmul.f32 %v625, 0.0078125
        %v763 = vmul.f32 %v627, 0.0078125
        %v764 = vmul.f32 %v629, 0.0078125
        %v765 = vmul.f32 %v631, 0.0078125
        %v766 = vmul.f32 %v633, 0.0078125
        %v767 = vmul.f32 %v635, 0.0078125
        %v768 = vmul.f32 %v637, 0.0078125
        %v769 = vmul.f32 %v639, 0.0078125
        %v770 = vmul.f32 %v641, 0.0078125
        %v771 = vmul.f32 %v643, 0.0078125
        %v772 = vmul.f32 %v677, 0.0078125
        %v773 = vmul.f32 %v679, 0.0078125
        %v774 = vmul.f32 %v681, 0.0078125
        %v775 = vmul.f32 %v683, 0.0078125
        %v776 = vmul.f32 %v685, 0.0078125
        %v777 = vmul.f32 %v687, 0.0078125
        %v778 = vmul.f32 %v689, 0.0078125
        %v779 = vmul.f32 %v691, 0.0078125
        %v780 = vmul.f32 %v693, 0.0078125
        %v781 = vmul.f32 %v695, 0.0078125
        %v782 = vmul.f32 %v697, 0.0078125
        %v783 = vmul.f32 %v699, 0.0078125
        %v784 = vmul.f32 %v701, 0.0078125
        %v785 = vmul.f32 %v703, 0.0078125
        %v786 = vmul.f32 %v705, 0.0078125
        %v787 = vmul.f32 %v707, 0.0078125
        %v788 = vmul.f32 %v709, 0.0078125
        %v789 = vmul.f32 %v711, 0.0078125
        %v790 = vmul.f32 %v713, 0.0078125
        %v791 = vmul.f32 %v715, 0.0078125
        %v792 = vmul.f32 %v717, 0.0078125
        %v793 = vmul.f32 %v719, 0.0078125
        %v794 = vmul.f32 %v721, 0.0078125
        %v795 = vmul.f32 %v723, 0.0078125
        %v796 = vmul.f32 %v725, 0.0078125
        %v797 = vmul.f32 %v727, 0.0078125
        %v798 = vmul.f32 %v729, 0.0078125
        %v799 = vmul.f32 %v731, 0.0078125
        %v800 = vmul.f32 %v733, 0.0078125
        %v801 = vmul.f32 %v735, 0.0078125
        %v802 = vmul.f32 %v737, 0.0078125
        %v803 = vmul.f32 %v739, 0.0078125
        %v804 = vmul.f32 %v740, %v740
        %v805 = vmul.f32 %v741, %v741
        %v806 = vmul.f32 %v742, %v742
        %v807 = vmul.f32 %v743, %v743
        %v808 = vmul.f32 %v744, %v744
        %v809 = vmul.f32 %v745, %v745
        %v810 = vmul.f32 %v746, %v746
        %v811 = vmul.f32 %v747, %v747
        %v812 = vmul.f32 %v748, %v748
        %v813 = vmul.f32 %v749, %v749
        %v814 = vmul.f32 %v750, %v750
        %v815 = vmul.f32 %v751, %v751
        %v816 = vmul.f32 %v752, %v752
        %v817 = vmul.f32 %v753, %v753
        %v818 = vmul.f32 %v754, %v754
        %v819 = vmul.f32 %v755, %v755
        %v820 = vmul.f32 %v756, %v756
        %v821 = vmul.f32 %v757, %v757
        %v822 = vmul.f32 %v758, %v758
        %v823 = vmul.f32 %v759, %v759
        %v824 = vmul.f32 %v760, %v760
        %v825 = vmul.f32 %v761, %v761
        %v826 = vmul.f32 %v762, %v762
        %v827 = vmul.f32 %v763, %v763
        %v828 = vmul.f32 %v764, %v764
        %v829 = vmul.f32 %v765, %v765
        %v830 = vmul.f32 %v766, %v766
        %v831 = vmul.f32 %v767, %v767
        %v832 = vmul.f32 %v768, %v768
        %v833 = vmul.f32 %v769, %v769
        %v834 = vmul.f32 %v770, %v770
        %v835 = vmul.f32 %v771, %v771
        %v836 = vsub.f32 %v772, %v804
        %v837 = vsub.f32 %v773, %v805
        %v838 = vsub.f32 %v774, %v806
        %v839 = vsub.f32 %v775, %v807
        %v840 = vsub.f32 %v776, %v808
        %v841 = vsub.f32 %v777, %v809
        %v842 = vsub.f32 %v778, %v810
        %v843 = vsub.f32 %v779, %v811
        %v844 = vsub.f32 %v780, %v812
        %v845 = vsub.f32 %v781, %v813
        %v846 = vsub.f32 %v782, %v814
        %v847 = vsub.f32 %v783, %v815
        %v848 = vsub.f32 %v784, %v816
        %v849 = vsub.f32 %v785, %v817
        %v850 = vsub.f32 %v786, %v818
        %v851 = vsub.f32 %v787, %v819
        %v852 = vsub.f32 %v788, %v820
        %v853 = vsub.f32 %v789, %v821
        %v854 = vsub.f32 %v790, %v822
        %v855 = vsub.f32 %v791, %v823
        %v856 = vsub.f32 %v792, %v824
        %v857 = vsub.f32 %v793, %v825
        %v858 = vsub.f32 %v794, %v826
        %v859 = vsub.f32 %v795, %v827
        %v860 = vsub.f32 %v796, %v828
        %v861 = vsub.f32 %v797, %v829
        %v862 = vsub.f32 %v798, %v830
        %v863 = vsub.f32 %v799, %v831
        %v864 = vsub.f32 %v800, %v832
        %v865 = vsub.f32 %v801, %v833
        %v866 = vsub.f32 %v802, %v834
        %v867 = vsub.f32 %v803, %v835
        %v868 = vadd.f32 %v836, 1e-05
        %v869 = vadd.f32 %v837, 1e-05
        %v870 = vadd.f32 %v838, 1e-05
        %v871 = vadd.f32 %v839, 1e-05
        %v872 = vadd.f32 %v840, 1e-05
        %v873 = vadd.f32 %v841, 1e-05
        %v874 = vadd.f32 %v842, 1e-05
        %v875 = vadd.f32 %v843, 1e-05
        %v876 = vadd.f32 %v844, 1e-05
        %v877 = vadd.f32 %v845, 1e-05
        %v878 = vadd.f32 %v846, 1e-05
        %v879 = vadd.f32 %v847, 1e-05
        %v880 = vadd.f32 %v848, 1e-05
        %v881 = vadd.f32 %v849, 1e-05
        %v882 = vadd.f32 %v850, 1e-05
        %v883 = vadd.f32 %v851, 1e-05
        %v884 = vadd.f32 %v852, 1e-05
        %v885 = vadd.f32 %v853, 1e-05
        %v886 = vadd.f32 %v854, 1e-05
        %v887 = vadd.f32 %v855, 1e-05
        %v888 = vadd.f32 %v856, 1e-05
        %v889 = vadd.f32 %v857, 1e-05
        %v890 = vadd.f32 %v858, 1e-05
        %v891 = vadd.f32 %v859, 1e-05
        %v892 = vadd.f32 %v860, 1e-05
        %v893 = vadd.f32 %v861, 1e-05
        %v894 = vadd.f32 %v862, 1e-05
        %v895 = vadd.f32 %v863, 1e-05
        %v896 = vadd.f32 %v864, 1e-05
        %v897 = vadd.f32 %v865, 1e-05
        %v898 = vadd.f32 %v866, 1e-05
        %v899 = vadd.f32 %v867, 1e-05
        %v900 = vrsqrt.pop %v868
        %v901 = vrsqrt.pop %v869
        %v902 = vrsqrt.pop %v870
        %v903 = vrsqrt.pop %v871
        %v904 = vrsqrt.pop %v872
        %v905 = vrsqrt.pop %v873
        %v906 = vrsqrt.pop %v874
        %v907 = vrsqrt.pop %v875
        %v908 = vrsqrt.pop %v876
        %v909 = vrsqrt.pop %v877
        %v910 = vrsqrt.pop %v878
        %v911 = vrsqrt.pop %v879
        %v912 = vrsqrt.pop %v880
        %v913 = vrsqrt.pop %v881
        %v914 = vrsqrt.pop %v882
        %v915 = vrsqrt.pop %v883
        %v916 = vrsqrt.pop %v884
        %v917 = vrsqrt.pop %v885
        %v918 = vrsqrt.pop %v886
        %v919 = vrsqrt.pop %v887
        %v920 = vrsqrt.pop %v888
        %v921 = vrsqrt.pop %v889
        %v922 = vrsqrt.pop %v890
        %v923 = vrsqrt.pop %v891
        %v924 = vrsqrt.pop %v892
        %v925 = vrsqrt.pop %v893
        %v926 = vrsqrt.pop %v894
        %v927 = vrsqrt.pop %v895
        %v928 = vrsqrt.pop %v896
        %v929 = vrsqrt.pop %v897
        %v930 = vrsqrt.pop %v898
        %v931 = vrsqrt.pop %v899
        %v932 = vsub.f32 %v454, %v740
        %v933 = vsub.f32 %v457, %v741
        %v934 = vsub.f32 %v462, %v742
        %v935 = vsub.f32 %v465, %v743
        %v936 = vsub.f32 %v470, %v744
        %v937 = vsub.f32 %v473, %v745
        %v938 = vsub.f32 %v478, %v746
        %v939 = vsub.f32 %v481, %v747
        %v940 = vsub.f32 %v486, %v748
        %v941 = vsub.f32 %v489, %v749
        %v942 = vsub.f32 %v494, %v750
        %v943 = vsub.f32 %v497, %v751
        %v944 = vsub.f32 %v502, %v752
        %v945 = vsub.f32 %v505, %v753
        %v946 = vsub.f32 %v510, %v754
        %v947 = vsub.f32 %v513, %v755
        %v948 = vsub.f32 %v518, %v756
        %v949 = vsub.f32 %v521, %v757
        %v950 = vsub.f32 %v526, %v758
        %v951 = vsub.f32 %v529, %v759
        %v952 = vsub.f32 %v534, %v760
        %v953 = vsub.f32 %v537, %v761
        %v954 = vsub.f32 %v542, %v762
        %v955 = vsub.f32 %v545, %v763
        %v956 = vsub.f32 %v550, %v764
        %v957 = vsub.f32 %v553, %v765
        %v958 = vsub.f32 %v558, %v766
        %v959 = vsub.f32 %v561, %v767
        %v960 = vsub.f32 %v566, %v768
        %v961 = vsub.f32 %v569, %v769
        %v962 = vsub.f32 %v574, %v770
        %v963 = vsub.f32 %v577, %v771
        %v964 = vmul.f32 %v932, %v900
        %v965 = vmul.f32 %v933, %v901
        %v966 = vmul.f32 %v934, %v902
        %v967 = vmul.f32 %v935, %v903
        %v968 = vmul.f32 %v936, %v904
        %v969 = vmul.f32 %v937, %v905
        %v970 = vmul.f32 %v938, %v906
        %v971 = vmul.f32 %v939, %v907
        %v972 = vmul.f32 %v940, %v908
        %v973 = vmul.f32 %v941, %v909
        %v974 = vmul.f32 %v942, %v910
        %v975 = vmul.f32 %v943, %v911
        %v976 = vmul.f32 %v944, %v912
        %v977 = vmul.f32 %v945, %v913
        %v978 = vmul.f32 %v946, %v914
        %v979 = vmul.f32 %v947, %v915
        %v980 = vmul.f32 %v948, %v916
        %v981 = vmul.f32 %v949, %v917
        %v982 = vmul.f32 %v950, %v918
        %v983 = vmul.f32 %v951, %v919
        %v984 = vmul.f32 %v952, %v920
        %v985 = vmul.f32 %v953, %v921
        %v986 = vmul.f32 %v954, %v922
        %v987 = vmul.f32 %v955, %v923
        %v988 = vmul.f32 %v956, %v924
        %v989 = vmul.f32 %v957, %v925
        %v990 = vmul.f32 %v958, %v926
        %v991 = vmul.f32 %v959, %v927
        %v992 = vmul.f32 %v960, %v928
        %v993 = vmul.f32 %v961, %v929
        %v994 = vmul.f32 %v962, %v930
        %v995 = vmul.f32 %v963, %v931
        %v996 = vld [vmem:[%s3] sm:$0x1]
        %v998 = vlaneseq
        %v999 = vshrl.u32 %v998, 7
        %v1000 = vsub.s32 0, %v999
        %v1001 = vrot.slane %v996, %v1000
        %v1003 = vmul.f32 %v964, %v1001
        %v1004 = vmul.f32 %v965, %v1001
        %v1005 = vmul.f32 %v966, %v1001
        %v1006 = vmul.f32 %v967, %v1001
        %v1007 = vmul.f32 %v968, %v1001
        %v1008 = vmul.f32 %v969, %v1001
        %v1009 = vmul.f32 %v970, %v1001
        %v1010 = vmul.f32 %v971, %v1001
        %v1011 = vmul.f32 %v972, %v1001
        %v1012 = vmul.f32 %v973, %v1001
        %v1013 = vmul.f32 %v974, %v1001
        %v1014 = vmul.f32 %v975, %v1001
        %v1015 = vmul.f32 %v976, %v1001
        %v1016 = vmul.f32 %v977, %v1001
        %v1017 = vmul.f32 %v978, %v1001
        %v1018 = vmul.f32 %v979, %v1001
        %v1019 = vmul.f32 %v980, %v1001
        %v1020 = vmul.f32 %v981, %v1001
        %v1021 = vmul.f32 %v982, %v1001
        %v1022 = vmul.f32 %v983, %v1001
        %v1023 = vmul.f32 %v984, %v1001
        %v1024 = vmul.f32 %v985, %v1001
        %v1025 = vmul.f32 %v986, %v1001
        %v1026 = vmul.f32 %v987, %v1001
        %v1027 = vmul.f32 %v988, %v1001
        %v1028 = vmul.f32 %v989, %v1001
        %v1029 = vmul.f32 %v990, %v1001
        %v1030 = vmul.f32 %v991, %v1001
        %v1031 = vmul.f32 %v992, %v1001
        %v1032 = vmul.f32 %v993, %v1001
        %v1033 = vmul.f32 %v994, %v1001
        %v1034 = vmul.f32 %v995, %v1001
        %v1035 = vld [vmem:[%s4] sm:$0x1]
        %v1037 = vlaneseq
        %v1038 = vshrl.u32 %v1037, 7
        %v1039 = vsub.s32 0, %v1038
        %v1040 = vrot.slane %v1035, %v1039
        %v1042 = vadd.f32 %v1003, %v1040
        %v1043 = vadd.f32 %v1004, %v1040
        %v1044 = vadd.f32 %v1005, %v1040
        %v1045 = vadd.f32 %v1006, %v1040
        %v1046 = vadd.f32 %v1007, %v1040
        %v1047 = vadd.f32 %v1008, %v1040
        %v1048 = vadd.f32 %v1009, %v1040
        %v1049 = vadd.f32 %v1010, %v1040
        %v1050 = vadd.f32 %v1011, %v1040
        %v1051 = vadd.f32 %v1012, %v1040
        %v1052 = vadd.f32 %v1013, %v1040
        %v1053 = vadd.f32 %v1014, %v1040
        %v1054 = vadd.f32 %v1015, %v1040
        %v1055 = vadd.f32 %v1016, %v1040
        %v1056 = vadd.f32 %v1017, %v1040
        %v1057 = vadd.f32 %v1018, %v1040
        %v1058 = vadd.f32 %v1019, %v1040
        %v1059 = vadd.f32 %v1020, %v1040
        %v1060 = vadd.f32 %v1021, %v1040
        %v1061 = vadd.f32 %v1022, %v1040
        %v1062 = vadd.f32 %v1023, %v1040
        %v1063 = vadd.f32 %v1024, %v1040
        %v1064 = vadd.f32 %v1025, %v1040
        %v1065 = vadd.f32 %v1026, %v1040
        %v1066 = vadd.f32 %v1027, %v1040
        %v1067 = vadd.f32 %v1028, %v1040
        %v1068 = vadd.f32 %v1029, %v1040
        %v1069 = vadd.f32 %v1030, %v1040
        %v1070 = vadd.f32 %v1031, %v1040
        %v1071 = vadd.f32 %v1032, %v1040
        %v1072 = vadd.f32 %v1033, %v1040
        %v1073 = vadd.f32 %v1034, %v1040
        %v1074 = vpack.c.bf16 %v1043, %v1042
        %v1075 = vpack.c.bf16 %v1045, %v1044
        %v1076 = vpack.c.bf16 %v1047, %v1046
        %v1077 = vpack.c.bf16 %v1049, %v1048
        %v1078 = vpack.c.bf16 %v1051, %v1050
        %v1079 = vpack.c.bf16 %v1053, %v1052
        %v1080 = vpack.c.bf16 %v1055, %v1054
        %v1081 = vpack.c.bf16 %v1057, %v1056
        %v1082 = vpack.c.bf16 %v1059, %v1058
        %v1083 = vpack.c.bf16 %v1061, %v1060
        %v1084 = vpack.c.bf16 %v1063, %v1062
        %v1085 = vpack.c.bf16 %v1065, %v1064
        %v1086 = vpack.c.bf16 %v1067, %v1066
        %v1087 = vpack.c.bf16 %v1069, %v1068
        %v1088 = vpack.c.bf16 %v1071, %v1070
        %v1089 = vpack.c.bf16 %v1073, %v1072
        %v1106 = vunpack.c.l.b16 %v1074
        %v1107 = vunpack.c.h.b16 %v1074
        %v1108 = vunpack.c.l.b16 %v1075
        %v1109 = vunpack.c.h.b16 %v1075
        %v1110 = vunpack.c.l.b16 %v1076
        %v1111 = vunpack.c.h.b16 %v1076
        %v1112 = vunpack.c.l.b16 %v1077
        %v1113 = vunpack.c.h.b16 %v1077
        %v1114 = vunpack.c.l.b16 %v1078
        %v1115 = vunpack.c.h.b16 %v1078
        %v1116 = vunpack.c.l.b16 %v1079
        %v1117 = vunpack.c.h.b16 %v1079
        %v1118 = vunpack.c.l.b16 %v1080
        %v1119 = vunpack.c.h.b16 %v1080
        %v1120 = vunpack.c.l.b16 %v1081
        %v1121 = vunpack.c.h.b16 %v1081
        %v1122 = vunpack.c.l.b16 %v1082
        %v1123 = vunpack.c.h.b16 %v1082
        %v1124 = vunpack.c.l.b16 %v1083
        %v1125 = vunpack.c.h.b16 %v1083
        %v1126 = vunpack.c.l.b16 %v1084
        %v1127 = vunpack.c.h.b16 %v1084
        %v1128 = vunpack.c.l.b16 %v1085
        %v1129 = vunpack.c.h.b16 %v1085
        %v1130 = vunpack.c.l.b16 %v1086
        %v1131 = vunpack.c.h.b16 %v1086
        %v1132 = vunpack.c.l.b16 %v1087
        %v1133 = vunpack.c.h.b16 %v1087
        %v1134 = vunpack.c.l.b16 %v1088
        %v1135 = vunpack.c.h.b16 %v1088
        %v1136 = vunpack.c.l.b16 %v1089
        %v1137 = vunpack.c.h.b16 %v1089
        %v1138 = vpack.c.b16 %v1106, %v1106
        %v1139 = vpack.c.b16 %v1107, %v1107
        %v1140 = vpack.c.b16 %v1108, %v1108
        %v1141 = vpack.c.b16 %v1109, %v1109
        %v1142 = vpack.c.b16 %v1110, %v1110
        %v1143 = vpack.c.b16 %v1111, %v1111
        %v1144 = vpack.c.b16 %v1112, %v1112
        %v1145 = vpack.c.b16 %v1113, %v1113
        %v1146 = vpack.c.b16 %v1114, %v1114
        %v1147 = vpack.c.b16 %v1115, %v1115
        %v1148 = vpack.c.b16 %v1116, %v1116
        %v1149 = vpack.c.b16 %v1117, %v1117
        %v1150 = vpack.c.b16 %v1118, %v1118
        %v1151 = vpack.c.b16 %v1119, %v1119
        %v1152 = vpack.c.b16 %v1120, %v1120
        %v1153 = vpack.c.b16 %v1121, %v1121
        %v1154 = vpack.c.b16 %v1122, %v1122
        %v1155 = vpack.c.b16 %v1123, %v1123
        %v1156 = vpack.c.b16 %v1124, %v1124
        %v1157 = vpack.c.b16 %v1125, %v1125
        %v1158 = vpack.c.b16 %v1126, %v1126
        %v1159 = vpack.c.b16 %v1127, %v1127
        %v1160 = vpack.c.b16 %v1128, %v1128
        %v1161 = vpack.c.b16 %v1129, %v1129
        %v1162 = vpack.c.b16 %v1130, %v1130
        %v1163 = vpack.c.b16 %v1131, %v1131
        %v1164 = vpack.c.b16 %v1132, %v1132
        %v1165 = vpack.c.b16 %v1133, %v1133
        %v1166 = vpack.c.b16 %v1134, %v1134
        %v1167 = vpack.c.b16 %v1135, %v1135
        %v1168 = vpack.c.b16 %v1136, %v1136
        %v1169 = vpack.c.b16 %v1137, %v1137
        %1202 = vst [vmem:[%s218] sm:$0xf] %v1138
        %1203 = vst [vmem:[%s218 + $0x4] sm:$0xf] %v1139
        %1204 = vst [vmem:[%s218 + $0x8] sm:$0xf] %v1140
        %1205 = vst [vmem:[%s218 + $0xc] sm:$0xf] %v1141
        %1206 = vst [vmem:[%s218 + $0x10] sm:$0xf] %v1142
        %1207 = vst [vmem:[%s218 + $0x14] sm:$0xf] %v1143
        %1208 = vst [vmem:[%s218 + $0x18] sm:$0xf] %v1144
        %1209 = vst [vmem:[%s218 + $0x1c] sm:$0xf] %v1145
        %1210 = vst [vmem:[%s218 + $0x20] sm:$0xf] %v1146
        %1211 = vst [vmem:[%s218 + $0x24] sm:$0xf] %v1147
        %1212 = vst [vmem:[%s218 + $0x28] sm:$0xf] %v1148
        %1213 = vst [vmem:[%s218 + $0x2c] sm:$0xf] %v1149
        %1214 = vst [vmem:[%s218 + $0x30] sm:$0xf] %v1150
        %1215 = vst [vmem:[%s218 + $0x34] sm:$0xf] %v1151
        %1216 = vst [vmem:[%s218 + $0x38] sm:$0xf] %v1152
        %1217 = vst [vmem:[%s218 + $0x3c] sm:$0xf] %v1153
        %1218 = vst [vmem:[%s218 + $0x40] sm:$0xf] %v1154
        %1219 = vst [vmem:[%s218 + $0x44] sm:$0xf] %v1155
        %1220 = vst [vmem:[%s218 + $0x48] sm:$0xf] %v1156
        %1221 = vst [vmem:[%s218 + $0x4c] sm:$0xf] %v1157
        %1222 = vst [vmem:[%s218 + $0x50] sm:$0xf] %v1158
        %1223 = vst [vmem:[%s218 + $0x54] sm:$0xf] %v1159
        %1224 = vst [vmem:[%s218 + $0x58] sm:$0xf] %v1160
        %1225 = vst [vmem:[%s218 + $0x5c] sm:$0xf] %v1161
        %1226 = vst [vmem:[%s218 + $0x60] sm:$0xf] %v1162
        %1227 = vst [vmem:[%s218 + $0x64] sm:$0xf] %v1163
        %1228 = vst [vmem:[%s218 + $0x68] sm:$0xf] %v1164
        %1229 = vst [vmem:[%s218 + $0x6c] sm:$0xf] %v1165
        %1230 = vst [vmem:[%s218 + $0x70] sm:$0xf] %v1166
        %1231 = vst [vmem:[%s218 + $0x74] sm:$0xf] %v1167
        %1232 = vst [vmem:[%s218 + $0x78] sm:$0xf] %v1168
        %1233 = vst [vmem:[%s218 + $0x7c] sm:$0xf] %v1169
        %s1234 = sand.u32 %s137, 1
        %s1235 = scalar_lea.sflag [#allocation3], %s1234
        %s1236 = sand.u32 %s137, 1
        %s1237 = smul.addr %s1236, 128
        %s1238 = scalar_lea.vmem [#allocation2], %s1237
        // Predicated region
        $region41: #{_lambda_.1} parent=39 // pred_check
          %p1239 = pneg %p147
        $region42: #{_lambda_.1} parent=39 // pred_check_branch
          %1241 = sbr.rel (%p1239) target = $region44
        $region43: #{_lambda_.1} parent=39 // pred_region
          %s1242 = smul.u32 32, %s19
          %s1244 = ssub.s32 2048, 2048
          %1245 = vsyncadd %s1235, %s1244
          %s1246 = smul.addr %s1242, 64
          %s1247 = scalar_lea.hbm %s5, %s1246
          %s1248 = sshll.u32 %s1238, 4
          %s1249 = int_to_ptr.vmem [resolvable:$true] %s1248
          %1254 = dma.vmem_to_hbm [thread:$0]  %s1249, 2048, %s1247, %s1235, 64, 64, 4
        $region44: #{_lambda_.1} parent=39 // pred_fallthru
          _
      $region40: #{_lambda_.1} parent=5 // pred_fallthru
        _
      %p1255 = scmp.le.s32.totalorder 2, %s14
      // Predicated region
      $region45: #{_lambda_.1} parent=5 // pred_check
        %p1256 = pneg %p1255
      $region46: #{_lambda_.1} parent=5 // pred_check_branch
        %1258 = sbr.rel (%p1256) target = $region48
      $region47: #{_lambda_.1} parent=5 // pred_region
        %s1259 = ssub.s32 %s14, 2
        // Predicated region
        $region49: #{_lambda_.1} parent=47 // pred_check
          %p1260 = pneg %p153
        $region50: #{_lambda_.1} parent=47 // pred_check_branch
          %1262 = sbr.rel (%p1260) target = $region52
        $region51: #{_lambda_.1} parent=47 // pred_region
          %s1263 = sand.u32 %s138, 1
          %s1264 = scalar_lea.sflag [#allocation3], %s1263
          %s1265 = sand.u32 %s138, 1
          %s1266 = smul.addr %s1265, 128
          %s1267 = scalar_lea.vmem [#allocation2], %s1266
          %1268 = dma.done %s1264, 2048
        $region52: #{_lambda_.1} parent=47 // pred_fallthru
          _
      $region48: #{_lambda_.1} parent=5 // pred_fallthru
        _
    $region6: #{_lambda_.1} parent=1 // loop_footer
      %s18 = sadd.s32 1, %s14
    $region7: #{_lambda_.1} parent=1 // loop_footer_branch
      %13 = sbr.rel target = $region3
    $region8: #{_lambda_.1} parent=1 // loop_exit
      _
    %1269 = vsyncpa [#allocation3], 1
    %s1270 = scalar_lea.sflag [#allocation3], 1
    %1271 = vsyncpa %s1270, 1

</llo_original>
